<compile_context>
chip_gen: v5e
topology: v5e:2x2
jax: 0.10.0
libtpu: 0.0.40
codegen_flags: <defaults>
</compile_context>

<pallas_src>
import functools

import jax
import jax.numpy as jnp
import numpy as np
from jax.experimental import pallas as pl
from jax.experimental.pallas import tpu as pltpu

LN_EPS = 1e-5   # torch.nn.LayerNorm default
LANE = 128


def _round_up(n, m):
    return ((n + m - 1) // m) * m


def _pad2d(x, rows, cols):
    return jnp.pad(x, ((0, rows - x.shape[0]), (0, cols - x.shape[1])))


def _pad_vec(x, width):
    x = x.reshape(-1)
    return jnp.pad(x, (0, width - x.shape[0]))


def _masked_layernorm(x, gamma, beta, mask, inv_n):
    """LayerNorm over the first n real lanes.

    Requires padded lanes of x / gamma / beta to be exact zeros; `mask` is a 0/1 f32 row
    selecting the real lanes (stored in the parameter slab, no iota/compare in-kernel).
    """
    mu = jnp.sum(x, axis=-1, keepdims=True) * inv_n        # padded lanes contribute 0.0 exactly
    c = (x - mu) * mask                                    # zero padded lanes before variance
    var = jnp.sum(c * c, axis=-1, keepdims=True) * inv_n
    return c * jax.lax.rsqrt(var + LN_EPS) * gamma + beta  # zero-padded gamma/beta keep pads 0


def context_kernel(att_ref, qv_ref, w_ref, pslab_ref, o_ref, *, inv_embed):
    # att_ref  : (R, R)     block-diagonal attention matrix (R = B*S folded rows)
    # qv_ref   : (2, R, W)  [q ; v], lane-dense, zero-padded to W = 128 lanes
    # w_ref    : (3, W, W)  [Ww ; f1w ; f2w], zero-padded weight slab
    # pslab_ref: (8, W)     [Wb, f1b, f2b, g1, b1, g2, b2, lane_mask]
    q = qv_ref[0]
    v = qv_ref[1]

    Wb   = pslab_ref[0:1, :]
    f1b  = pslab_ref[1:2, :]
    f2b  = pslab_ref[2:3, :]
    g1   = pslab_ref[3:4, :]
    b1   = pslab_ref[4:5, :]
    g2   = pslab_ref[5:6, :]
    b2   = pslab_ref[6:7, :]
    mask = pslab_ref[7:8, :]

    wdt = w_ref.dtype  # f32 by default; optionally bf16 (accumulation stays f32)

    # v = att_mtx @ W(v): one block-diagonal MXU push instead of B tiny batched matmuls.
    vW = jnp.dot(v.astype(wdt), w_ref[0], preferred_element_type=jnp.float32) + Wb
    ctx = jnp.dot(att_ref[...], vW, preferred_element_type=jnp.float32)

    # v = norm1(v + q)
    hn = _masked_layernorm(ctx + q, g1, b1, mask, inv_embed)

    # v = norm2(v + ff(v)),  ff = Linear -> ReLU -> Linear
    f1 = jnp.maximum(
        jnp.dot(hn.astype(wdt), w_ref[1], preferred_element_type=jnp.float32) + f1b, 0.0)
    ff = jnp.dot(f1.astype(wdt), w_ref[2], preferred_element_type=jnp.float32) + f2b
    o_ref[...] = _masked_layernorm(hn + ff, g2, b2, mask, inv_embed)


def prepare_params(params, *, weights_dtype=jnp.float32):
    """One-time packing of module parameters into lane-dense, zero-padded slabs.

    Called once at init; the per-call wrapper never touches the raw parameters again.
    """
    E = params["Ww"].shape[0]
    FF = params["f1w"].shape[1]
    wide = max(_round_up(E, LANE), _round_up(FF, LANE))

    # One (3, wide, wide) slab -> a single DMA carries all three matmul weights.
    wstack = jnp.stack([
        _pad2d(params["Ww"], wide, wide),
        _pad2d(params["f1w"], wide, wide),
        _pad2d(params["f2w"], wide, wide),
    ]).astype(weights_dtype)

    # One (8, wide) slab carries all bias / LayerNorm vectors plus the LN lane mask.
    lane_mask = (jnp.arange(wide) < E).astype(jnp.float32)
    pslab = jnp.stack([
        _pad_vec(params["Wb"], wide),
        _pad_vec(params["f1b"], wide),
        _pad_vec(params["f2b"], wide),
        _pad_vec(params["g1"], wide),
        _pad_vec(params["b1"], wide),
        _pad_vec(params["g2"], wide),
        _pad_vec(params["b2"], wide),
        lane_mask,
    ], axis=0)

    return {"wstack": wstack, "pslab": pslab, "embed_dim": E, "wide": wide}


def make_context_forward(packed):
    wstack = packed["wstack"]
    pslab = packed["pslab"]
    E = packed["embed_dim"]
    wide = packed["wide"]
    inv_embed = 1.0 / E

    @jax.jit
    def forward(att_mtx, q, v):
        B, S, _ = q.shape
        R = B * S

        # Lane-dense, batch-folded activations: one (2, R, wide) input DMA.
        qv = jnp.pad(jnp.stack([q.reshape(R, E), v.reshape(R, E)]),
                     ((0, 0), (0, 0), (0, wide - E)))

        # Block-diagonal attention: folds the B batched (S,S)@(S,E) matmuls into one
        # (R,R)@(R,wide) MXU push inside the kernel (pure layout plumbing here).
        att_bd = (att_mtx[:, :, None, :] *
                  jnp.eye(B, dtype=att_mtx.dtype)[:, None, :, None]).reshape(R, R)

        vmem = pl.BlockSpec(memory_space=pltpu.MemorySpace.VMEM)
        # TODO(synk): at production-scale S/E, add a grid (row axis "parallel" so v7x's two
        # TensorCores are used, reduction axis "arbitrary" with a VMEM f32 accumulator),
        # size double-buffered tiles against v7x's 64 MiB VMEM with an explicit
        # vmem_limit_bytes, and use 256-wide MXU tiles on v6e/v7x (128 on v5e).  At the
        # current tiny shape a single invocation is strictly faster.
        out = pl.pallas_call(
            functools.partial(context_kernel, inv_embed=inv_embed),
            out_shape=jax.ShapeDtypeStruct((R, wide), jnp.float32),
            in_specs=[vmem] * 4,
            out_specs=vmem,
        )(att_bd, qv, wstack, pslab)

        return out[:, :E].reshape(B, S, E)

    return forward


def _layernorm_ref(x, gamma, beta):
    mu = jnp.mean(x, axis=-1, keepdims=True)
    var = jnp.mean((x - mu) ** 2, axis=-1, keepdims=True)
    return (x - mu) * jax.lax.rsqrt(var + LN_EPS) * gamma + beta


def reference_forward(att_mtx, q, v, params):
    vW = v @ params["Ww"] + params["Wb"]
    ctx = jnp.einsum("bij,bjd->bid", att_mtx, vW)
    hn = _layernorm_ref(ctx + q, params["g1"], params["b1"])
    ff = jnp.maximum(hn @ params["f1w"] + params["f1b"], 0.0) @ params["f2w"] + params["f2b"]
    return _layernorm_ref(hn + ff, params["g2"], params["b2"])


if __name__ == "__main__":
    B, S, E, FF = 2, 8, 32, 64  # batch, seq, embed_dim, ff_dim

    key = jax.random.PRNGKey(0)
    keys = jax.random.split(key, 8)

    # deterministic parameter init (synthetic; no checkpoint load)
    params = {
        "Ww":  0.1 * jax.random.normal(keys[0], (E, E),  jnp.float32),
        "Wb":  0.1 * jax.random.normal(keys[1], (1, E),  jnp.float32),
        "f1w": 0.1 * jax.random.normal(keys[2], (E, FF), jnp.float32),
        "f1b": 0.1 * jax.random.normal(keys[3], (1, FF), jnp.float32),
        "f2w": 0.1 * jax.random.normal(keys[4], (FF, E), jnp.float32),
        "f2b": 0.1 * jax.random.normal(keys[5], (1, E),  jnp.float32),
        "g1":  jnp.ones((1, E), jnp.float32),
        "b1":  jnp.zeros((1, E), jnp.float32),
        "g2":  jnp.ones((1, E), jnp.float32),
        "b2":  jnp.zeros((1, E), jnp.float32),
    }

    # inputs: att_mtx is a softmax distribution over the seq axis
    logits = jax.random.normal(keys[6], (B, S, S), jnp.float32)
    att_mtx = jax.nn.softmax(logits, axis=-1)
    qv_in = jax.random.normal(keys[7], (2, B, S, E), jnp.float32)
    q, v = qv_in[0], qv_in[1]

    # One-time init: all parameter padding / packing hoisted off the hot path.
    packed = jax.tree_util.tree_map(
        lambda x: jax.block_until_ready(x) if isinstance(x, jax.Array) else x,
        prepare_params(params))
    context_forward = make_context_forward(packed)

    out = jax.block_until_ready(context_forward(att_mtx, q, v))
    ref = reference_forward(att_mtx, q, v, params)
    np.testing.assert_allclose(np.asarray(out), np.asarray(ref), atol=1e-4, rtol=1e-4)

    print("KERNEL_OK")
</pallas_src>

<mosaic_0001>
module attributes {stable_mosaic.version = 11 : i64} {
  func.func @context_kernel(%arg0: memref<16x16xf32, #tpu.memory_space<vmem>>, %arg1: memref<2x16x128xf32, #tpu.memory_space<vmem>>, %arg2: memref<3x128x128xf32, #tpu.memory_space<vmem>>, %arg3: memref<8x128xf32, #tpu.memory_space<vmem>>, %arg4: memref<16x128xf32, #tpu.memory_space<vmem>>) attributes {dimension_semantics = [], scalar_prefetch = 0 : i64, scratch_operands = 0 : i64, tpu.core_type = #tpu.core_type<tc>} {
    %c0 = arith.constant 0 : index
    %c0_0 = arith.constant 0 : index
    %c0_1 = arith.constant 0 : index
    %0 = vector.load %arg1[%c0, %c0_0, %c0_1] : memref<2x16x128xf32, #tpu.memory_space<vmem>>, vector<1x16x128xf32>
    %1 = vector.shape_cast %0 : vector<1x16x128xf32> to vector<16x128xf32>
    %c1 = arith.constant 1 : index
    %c0_2 = arith.constant 0 : index
    %c0_3 = arith.constant 0 : index
    %2 = vector.load %arg1[%c1, %c0_2, %c0_3] : memref<2x16x128xf32, #tpu.memory_space<vmem>>, vector<1x16x128xf32>
    %3 = vector.shape_cast %2 : vector<1x16x128xf32> to vector<16x128xf32>
    %c0_4 = arith.constant 0 : index
    %c0_5 = arith.constant 0 : index
    %4 = vector.load %arg3[%c0_4, %c0_5] : memref<8x128xf32, #tpu.memory_space<vmem>>, vector<1x128xf32>
    %c1_6 = arith.constant 1 : index
    %c0_7 = arith.constant 0 : index
    %5 = vector.load %arg3[%c1_6, %c0_7] : memref<8x128xf32, #tpu.memory_space<vmem>>, vector<1x128xf32>
    %c2 = arith.constant 2 : index
    %c0_8 = arith.constant 0 : index
    %6 = vector.load %arg3[%c2, %c0_8] : memref<8x128xf32, #tpu.memory_space<vmem>>, vector<1x128xf32>
    %c3 = arith.constant 3 : index
    %c0_9 = arith.constant 0 : index
    %7 = vector.load %arg3[%c3, %c0_9] : memref<8x128xf32, #tpu.memory_space<vmem>>, vector<1x128xf32>
    %c4 = arith.constant 4 : index
    %c0_10 = arith.constant 0 : index
    %8 = vector.load %arg3[%c4, %c0_10] : memref<8x128xf32, #tpu.memory_space<vmem>>, vector<1x128xf32>
    %c5 = arith.constant 5 : index
    %c0_11 = arith.constant 0 : index
    %9 = vector.load %arg3[%c5, %c0_11] : memref<8x128xf32, #tpu.memory_space<vmem>>, vector<1x128xf32>
    %c6 = arith.constant 6 : index
    %c0_12 = arith.constant 0 : index
    %10 = vector.load %arg3[%c6, %c0_12] : memref<8x128xf32, #tpu.memory_space<vmem>>, vector<1x128xf32>
    %c7 = arith.constant 7 : index
    %c0_13 = arith.constant 0 : index
    %11 = vector.load %arg3[%c7, %c0_13] : memref<8x128xf32, #tpu.memory_space<vmem>>, vector<1x128xf32>
    %c0_14 = arith.constant 0 : index
    %c0_15 = arith.constant 0 : index
    %c0_16 = arith.constant 0 : index
    %12 = vector.load %arg2[%c0_14, %c0_15, %c0_16] : memref<3x128x128xf32, #tpu.memory_space<vmem>>, vector<1x128x128xf32>
    %13 = vector.shape_cast %12 : vector<1x128x128xf32> to vector<128x128xf32>
    %cst = arith.constant dense<0.000000e+00> : vector<16x128xf32>
    %14 = tpu.matmul %3, %13, %cst {dimension_numbers = #tpu.dot_dimension_numbers<[1], [0], [0], [1], [0, 0, 1, 1], [], []>} : vector<16x128xf32>, vector<128x128xf32>, vector<16x128xf32> -> vector<16x128xf32>
    %15 = vector.broadcast %4 : vector<1x128xf32> to vector<16x128xf32>
    %16 = arith.addf %14, %15 : vector<16x128xf32>
    %c0_17 = arith.constant 0 : index
    %c0_18 = arith.constant 0 : index
    %17 = vector.load %arg0[%c0_17, %c0_18] : memref<16x16xf32, #tpu.memory_space<vmem>>, vector<16x16xf32>
    %cst_19 = arith.constant dense<0.000000e+00> : vector<16x128xf32>
    %18 = tpu.matmul %17, %16, %cst_19 {dimension_numbers = #tpu.dot_dimension_numbers<[1], [0], [0], [1], [0, 0, 1, 1], [], []>} : vector<16x16xf32>, vector<16x128xf32>, vector<16x128xf32> -> vector<16x128xf32>
    %19 = arith.addf %18, %1 : vector<16x128xf32>
    %cst_20 = arith.constant dense<0.000000e+00> : vector<16xf32>
    %20 = vector.multi_reduction <add>, %19, %cst_20 [1] : vector<16x128xf32> to vector<16xf32>
    %21 = vector.shape_cast %20 : vector<16xf32> to vector<16x1xf32>
    %cst_21 = arith.constant 3.125000e-02 : f32
    %22 = vector.broadcast %cst_21 : f32 to vector<16x1xf32>
    %23 = arith.mulf %21, %22 : vector<16x1xf32>
    %24 = vector.broadcast %23 : vector<16x1xf32> to vector<16x128xf32>
    %25 = arith.subf %19, %24 : vector<16x128xf32>
    %26 = vector.broadcast %11 : vector<1x128xf32> to vector<16x128xf32>
    %27 = arith.mulf %25, %26 : vector<16x128xf32>
    %28 = arith.mulf %27, %27 : vector<16x128xf32>
    %cst_22 = arith.constant dense<0.000000e+00> : vector<16xf32>
    %29 = vector.multi_reduction <add>, %28, %cst_22 [1] : vector<16x128xf32> to vector<16xf32>
    %30 = vector.shape_cast %29 : vector<16xf32> to vector<16x1xf32>
    %cst_23 = arith.constant 3.125000e-02 : f32
    %31 = vector.broadcast %cst_23 : f32 to vector<16x1xf32>
    %32 = arith.mulf %30, %31 : vector<16x1xf32>
    %cst_24 = arith.constant 9.99999974E-6 : f32
    %33 = vector.broadcast %cst_24 : f32 to vector<16x1xf32>
    %34 = arith.addf %32, %33 : vector<16x1xf32>
    %35 = math.rsqrt %34 : vector<16x1xf32>
    %36 = vector.broadcast %35 : vector<16x1xf32> to vector<16x128xf32>
    %37 = arith.mulf %27, %36 : vector<16x128xf32>
    %38 = vector.broadcast %7 : vector<1x128xf32> to vector<16x128xf32>
    %39 = arith.mulf %37, %38 : vector<16x128xf32>
    %40 = vector.broadcast %8 : vector<1x128xf32> to vector<16x128xf32>
    %41 = arith.addf %39, %40 : vector<16x128xf32>
    %c1_25 = arith.constant 1 : index
    %c0_26 = arith.constant 0 : index
    %c0_27 = arith.constant 0 : index
    %42 = vector.load %arg2[%c1_25, %c0_26, %c0_27] : memref<3x128x128xf32, #tpu.memory_space<vmem>>, vector<1x128x128xf32>
    %43 = vector.shape_cast %42 : vector<1x128x128xf32> to vector<128x128xf32>
    %cst_28 = arith.constant dense<0.000000e+00> : vector<16x128xf32>
    %44 = tpu.matmul %41, %43, %cst_28 {dimension_numbers = #tpu.dot_dimension_numbers<[1], [0], [0], [1], [0, 0, 1, 1], [], []>} : vector<16x128xf32>, vector<128x128xf32>, vector<16x128xf32> -> vector<16x128xf32>
    %45 = vector.broadcast %5 : vector<1x128xf32> to vector<16x128xf32>
    %46 = arith.addf %44, %45 : vector<16x128xf32>
    %cst_29 = arith.constant 0.000000e+00 : f32
    %47 = vector.broadcast %cst_29 : f32 to vector<16x128xf32>
    %48 = arith.maximumf %46, %47 : vector<16x128xf32>
    %c2_30 = arith.constant 2 : index
    %c0_31 = arith.constant 0 : index
    %c0_32 = arith.constant 0 : index
    %49 = vector.load %arg2[%c2_30, %c0_31, %c0_32] : memref<3x128x128xf32, #tpu.memory_space<vmem>>, vector<1x128x128xf32>
    %50 = vector.shape_cast %49 : vector<1x128x128xf32> to vector<128x128xf32>
    %cst_33 = arith.constant dense<0.000000e+00> : vector<16x128xf32>
    %51 = tpu.matmul %48, %50, %cst_33 {dimension_numbers = #tpu.dot_dimension_numbers<[1], [0], [0], [1], [0, 0, 1, 1], [], []>} : vector<16x128xf32>, vector<128x128xf32>, vector<16x128xf32> -> vector<16x128xf32>
    %52 = vector.broadcast %6 : vector<1x128xf32> to vector<16x128xf32>
    %53 = arith.addf %51, %52 : vector<16x128xf32>
    %54 = arith.addf %41, %53 : vector<16x128xf32>
    %cst_34 = arith.constant dense<0.000000e+00> : vector<16xf32>
    %55 = vector.multi_reduction <add>, %54, %cst_34 [1] : vector<16x128xf32> to vector<16xf32>
    %56 = vector.shape_cast %55 : vector<16xf32> to vector<16x1xf32>
    %cst_35 = arith.constant 3.125000e-02 : f32
    %57 = vector.broadcast %cst_35 : f32 to vector<16x1xf32>
    %58 = arith.mulf %56, %57 : vector<16x1xf32>
    %59 = vector.broadcast %58 : vector<16x1xf32> to vector<16x128xf32>
    %60 = arith.subf %54, %59 : vector<16x128xf32>
    %61 = vector.broadcast %11 : vector<1x128xf32> to vector<16x128xf32>
    %62 = arith.mulf %60, %61 : vector<16x128xf32>
    %63 = arith.mulf %62, %62 : vector<16x128xf32>
    %cst_36 = arith.constant dense<0.000000e+00> : vector<16xf32>
    %64 = vector.multi_reduction <add>, %63, %cst_36 [1] : vector<16x128xf32> to vector<16xf32>
    %65 = vector.shape_cast %64 : vector<16xf32> to vector<16x1xf32>
    %cst_37 = arith.constant 3.125000e-02 : f32
    %66 = vector.broadcast %cst_37 : f32 to vector<16x1xf32>
    %67 = arith.mulf %65, %66 : vector<16x1xf32>
    %cst_38 = arith.constant 9.99999974E-6 : f32
    %68 = vector.broadcast %cst_38 : f32 to vector<16x1xf32>
    %69 = arith.addf %67, %68 : vector<16x1xf32>
    %70 = math.rsqrt %69 : vector<16x1xf32>
    %71 = vector.broadcast %70 : vector<16x1xf32> to vector<16x128xf32>
    %72 = arith.mulf %62, %71 : vector<16x128xf32>
    %73 = vector.broadcast %9 : vector<1x128xf32> to vector<16x128xf32>
    %74 = arith.mulf %72, %73 : vector<16x128xf32>
    %75 = vector.broadcast %10 : vector<1x128xf32> to vector<16x128xf32>
    %76 = arith.addf %74, %75 : vector<16x128xf32>
    %c0_39 = arith.constant 0 : index
    %c0_40 = arith.constant 0 : index
    %77 = vector.load %arg4[%c0_39, %c0_40] : memref<16x128xf32, #tpu.memory_space<vmem>>, vector<16x128xf32>
    tpu.vector_store %arg4[%c0_39, %c0_40], %76 {strides = array<i32>} : memref<16x128xf32, #tpu.memory_space<vmem>>, vector<16x128xf32>,
    return
  }
}

</mosaic_0001>

<llo_original>
// kernel: forward.1
$region0: #{forward.1}
  #allocation0 [shape = 'u32[]', space=smem, size = 0x4, offset = 0x4, fixed_abs, tag = 'smem constant byte address 0x4 - core index']
  #allocation1 [shape = 'u32[72,128]{1,0:T(1,128)}', space=vmem, size = 0x9000, scoped, tag = 'internal scratch']
  %s0 = inlined_call_operand.vmem [shape: f32[16,16], index: 0, kind: input, shape index: {}]
  %s1 = inlined_call_operand.vmem [shape: f32[2,16,128], index: 1, kind: input, shape index: {}]
  %s2 = inlined_call_operand.hbm [shape: f32[3,128,128], index: 2, kind: input, shape index: {}]
  %s3 = inlined_call_operand.vmem [shape: f32[8,128], index: 3, kind: input, shape index: {}]
  %s4 = inlined_call_operand.vmem [shape: f32[16,128], index: 4, kind: output, shape index: {}]
  %s5 = sld [smem:[#allocation0]]
  $region30: #{forward.1} parent=0
    _
  %s7 = ssub.s32 1, %s5
  %s8 = scalar_select 0, %s7, %s5
  $region1: #{forward.1} parent=0
    #allocation2 [shape = 'u8[196608]{0}', space=vmem, size = 0x30000, scoped, tag = 'input window, operand 2, single buffered']
    #allocation3 [shape = 's32[1]{0}', space=sflag, size = 0x4, scoped, tag = 'scoped memory for forward.1']
    %9 = vsyncpa [#allocation3], 0
    // Predicated region
    $region2: #{forward.1} parent=1 // pred_check
      _
    $region3: #{forward.1} parent=1 // pred_check_branch
      %11 = sbr.rel (0) target = $region5
    $region4: #{forward.1} parent=1 // pred_region
      _
    $region5: #{forward.1} parent=1 // pred_fallthru
      _
    // Predicated region
    $region6: #{forward.1} parent=1 // pred_check
      _
    $region7: #{forward.1} parent=1 // pred_check_branch
      %13 = sbr.rel (0) target = $region9
    $region8: #{forward.1} parent=1 // pred_region
      _
    $region9: #{forward.1} parent=1 // pred_fallthru
      _
    // Predicated region
    $region10: #{forward.1} parent=1 // pred_check
      _
    $region11: #{forward.1} parent=1 // pred_check_branch
      %15 = sbr.rel (0) target = $region13
    $region12: #{forward.1} parent=1 // pred_region
      %17 = vsyncadd [#allocation3], 0
      %s18 = sshll.u32 %s2, 4
      %s19 = int_to_ptr.hbm [resolvable:$true] %s18
      %s20 = sshll.u32 [#allocation2], 4
      %s21 = int_to_ptr.vmem [resolvable:$true] %s20
      %26 = dma.hbm_to_vmem [thread:$0]  %s19, 6144, %s21, [#allocation3], 128, 128, 8
    $region13: #{forward.1} parent=1 // pred_fallthru
      _
    // Predicated region
    $region14: #{forward.1} parent=1 // pred_check
      _
    $region15: #{forward.1} parent=1 // pred_check_branch
      %28 = sbr.rel (0) target = $region17
    $region16: #{forward.1} parent=1 // pred_region
      _
    $region17: #{forward.1} parent=1 // pred_fallthru
      _
    // Predicated region
    $region18: #{forward.1} parent=1 // pred_check
      _
    $region19: #{forward.1} parent=1 // pred_check_branch
      %30 = sbr.rel (0) target = $region21
    $region20: #{forward.1} parent=1 // pred_region
      %32 = dma.done [#allocation3], 6144
    $region21: #{forward.1} parent=1 // pred_fallthru
      _
    %v33 = vld [vmem:[%s1] sm:$0xff]
    %v34 = vld [vmem:[%s1 + $0x8] sm:$0xff]
    %s35 = scalar_lea.vmem %s1, 16
    %v36 = vld [vmem:[%s35] sm:$0xff]
    %v37 = vld [vmem:[%s35 + $0x8] sm:$0xff]
    %v38 = vld [vmem:[%s3] sm:$0x1]
    %v39 = vld [vmem:[%s3 + $0x1] sm:$0x1]
    %v40 = vld [vmem:[%s3 + $0x2] sm:$0x1]
    %v41 = vld [vmem:[%s3 + $0x3] sm:$0x1]
    %v42 = vld [vmem:[%s3 + $0x4] sm:$0x1]
    %v43 = vld [vmem:[%s3 + $0x5] sm:$0x1]
    %v44 = vld [vmem:[%s3 + $0x6] sm:$0x1]
    %v45 = vld [vmem:[%s3 + $0x7] sm:$0x1]
    %v46 = vld [vmem:[#allocation2] sm:$0xff]
    %v47 = vld [vmem:[#allocation2 + $0x8] sm:$0xff]
    %v48 = vld [vmem:[#allocation2 + $0x10] sm:$0xff]
    %v49 = vld [vmem:[#allocation2 + $0x18] sm:$0xff]
    %v50 = vld [vmem:[#allocation2 + $0x20] sm:$0xff]
    %v51 = vld [vmem:[#allocation2 + $0x28] sm:$0xff]
    %v52 = vld [vmem:[#allocation2 + $0x30] sm:$0xff]
    %v53 = vld [vmem:[#allocation2 + $0x38] sm:$0xff]
    %v54 = vld [vmem:[#allocation2 + $0x40] sm:$0xff]
    %v55 = vld [vmem:[#allocation2 + $0x48] sm:$0xff]
    %v56 = vld [vmem:[#allocation2 + $0x50] sm:$0xff]
    %v57 = vld [vmem:[#allocation2 + $0x58] sm:$0xff]
    %v58 = vld [vmem:[#allocation2 + $0x60] sm:$0xff]
    %v59 = vld [vmem:[#allocation2 + $0x68] sm:$0xff]
    %v60 = vld [vmem:[#allocation2 + $0x70] sm:$0xff]
    %v61 = vld [vmem:[#allocation2 + $0x78] sm:$0xff]
    %v62 = vperm.slane %v38, 0
    %63 = vmatpush.msra.mxu0 %v61
    %64 = vmatpush.msra.mxu0 %v60
    %65 = vmatpush.msra.mxu0 %v59
    %66 = vmatpush.msra.mxu0 %v58
    %67 = vmatpush.msra.mxu0 %v57
    %68 = vmatpush.msra.mxu0 %v56
    %69 = vmatpush.msra.mxu0 %v55
    %70 = vmatpush.msra.mxu0 %v54
    %71 = vmatpush.msra.mxu0 %v53
    %72 = vmatpush.msra.mxu0 %v52
    %73 = vmatpush.msra.mxu0 %v51
    %74 = vmatpush.msra.mxu0 %v50
    %75 = vmatpush.msra.mxu0 %v49
    %76 = vmatpush.msra.mxu0 %v48
    %77 = vmatpush.msra.mxu0 %v47
    %78 = vmatpush.msra.mxu0 %v46
    %79 = vmatmul.f32.gmra.mxu0 %v36
    %v80 = vpop.f32.mrf.mxu0
    %v81 = vadd.f32 %v62, %v80
    %82 = vmatmul.f32.gmra.mxu0 %v37
    %v83 = vpop.f32.mrf.mxu0
    %v84 = vadd.f32 %v62, %v83
    %85 = vdwg.mxu0
    %v86 = vld [vmem:[%s0] sm:$0xff]
    %v87 = vld [vmem:[%s0 + $0x8] sm:$0xff]
    %vm88 = vcmask 130048
    %v90 = vsel %vm88, %v86, 0
    %v93 = vsel %vm88, %v87, 0
    %95 = vmatpush.msra.mxu0 0.0
    %96 = vmatpush.msra.mxu0 0.0
    %97 = vmatpush.msra.mxu0 0.0
    %98 = vmatpush.msra.mxu0 0.0
    %99 = vmatpush.msra.mxu0 0.0
    %100 = vmatpush.msra.mxu0 0.0
    %101 = vmatpush.msra.mxu0 0.0
    %102 = vmatpush.msra.mxu0 0.0
    %103 = vmatpush.msra.mxu0 0.0
    %104 = vmatpush.msra.mxu0 0.0
    %105 = vmatpush.msra.mxu0 0.0
    %106 = vmatpush.msra.mxu0 0.0
    %107 = vmatpush.msra.mxu0 0.0
    %108 = vmatpush.msra.mxu0 0.0
    %109 = vmatpush.msra.mxu0 %v84
    %110 = vmatpush.msra.mxu0 %v81
    %111 = vmatmul.f32.gmra.mxu0 %v90
    %v112 = vpop.f32.mrf.mxu0
    %v113 = vadd.f32 %v33, %v112
    %114 = vmatmul.f32.gmra.mxu0 %v93
    %v115 = vpop.f32.mrf.mxu0
    %v116 = vadd.f32 %v34, %v115
    %117 = vdwg.mxu0
    %118 = vadd.xlane.f32.xlu0 %v113
    %v119 = vpop.xlane.xlu0 %118
    %120 = vadd.xlane.f32.xlu0 %v116
    %v121 = vpop.xlane.xlu0 %120
    %v122 = vmul.f32 %v119, 0.03125
    %v123 = vmul.f32 %v121, 0.03125
    %v124 = vsub.f32 %v113, %v122
    %v125 = vsub.f32 %v116, %v123
    %v126 = vperm.slane %v45, 0
    %v127 = vmul.f32 %v124, %v126
    %v128 = vmul.f32 %v125, %v126
    %v129 = vmul.f32 %v127, %v127
    %v130 = vmul.f32 %v128, %v128
    %131 = vadd.xlane.f32.xlu0 %v129
    %v132 = vpop.xlane.xlu0 %131
    %133 = vadd.xlane.f32.xlu0 %v130
    %v134 = vpop.xlane.xlu0 %133
    %v135 = vmul.f32 %v132, 0.03125
    %v136 = vmul.f32 %v134, 0.03125
    %v137 = vadd.f32 %v135, 1e-05
    %v138 = vadd.f32 %v136, 1e-05
    %v139 = vrsqrt.pop %v137
    %v140 = vmul.f32 %v139, %v137
    %v141 = vmul.f32 %v140, %v139
    %v142 = vmul.f32 0.5, %v141
    %v143 = vsub.f32 1.5, %v142
    %v144 = vmul.f32 %v139, %v143
    %vm145 = vweird.f32 %v137
    %vm146 = vweird.f32 %v139
    %vm147 = vmor %vm145, %vm146
    %v148 = vsel %vm147, %v139, %v144
    %v149 = vrsqrt.pop %v138
    %v150 = vmul.f32 %v149, %v138
    %v151 = vmul.f32 %v150, %v149
    %v152 = vmul.f32 0.5, %v151
    %v153 = vsub.f32 1.5, %v152
    %v154 = vmul.f32 %v149, %v153
    %vm155 = vweird.f32 %v138
    %vm156 = vweird.f32 %v149
    %vm157 = vmor %vm155, %vm156
    %v158 = vsel %vm157, %v149, %v154
    %v159 = vmul.f32 %v127, %v148
    %v160 = vmul.f32 %v128, %v158
    %v161 = vperm.slane %v41, 0
    %v162 = vmul.f32 %v159, %v161
    %v163 = vmul.f32 %v160, %v161
    %v164 = vperm.slane %v42, 0
    %v165 = vadd.f32 %v162, %v164
    %v166 = vadd.f32 %v163, %v164
    %s167 = scalar_lea.vmem [#allocation2], 128
    %v168 = vld [vmem:[%s167] sm:$0xff]
    %v169 = vld [vmem:[%s167 + $0x8] sm:$0xff]
    %v170 = vld [vmem:[%s167 + $0x10] sm:$0xff]
    %v171 = vld [vmem:[%s167 + $0x18] sm:$0xff]
    %v172 = vld [vmem:[%s167 + $0x20] sm:$0xff]
    %v173 = vld [vmem:[%s167 + $0x28] sm:$0xff]
    %v174 = vld [vmem:[%s167 + $0x30] sm:$0xff]
    %v175 = vld [vmem:[%s167 + $0x38] sm:$0xff]
    %v176 = vld [vmem:[%s167 + $0x40] sm:$0xff]
    %v177 = vld [vmem:[%s167 + $0x48] sm:$0xff]
    %v178 = vld [vmem:[%s167 + $0x50] sm:$0xff]
    %v179 = vld [vmem:[%s167 + $0x58] sm:$0xff]
    %v180 = vld [vmem:[%s167 + $0x60] sm:$0xff]
    %v181 = vld [vmem:[%s167 + $0x68] sm:$0xff]
    %v182 = vld [vmem:[%s167 + $0x70] sm:$0xff]
    %v183 = vld [vmem:[%s167 + $0x78] sm:$0xff]
    %v184 = vperm.slane %v39, 0
    %185 = vmatpush.msra.mxu0 %v183
    %186 = vmatpush.msra.mxu0 %v182
    %187 = vmatpush.msra.mxu0 %v181
    %188 = vmatpush.msra.mxu0 %v180
    %189 = vmatpush.msra.mxu0 %v179
    %190 = vmatpush.msra.mxu0 %v178
    %191 = vmatpush.msra.mxu0 %v177
    %192 = vmatpush.msra.mxu0 %v176
    %193 = vmatpush.msra.mxu0 %v175
    %194 = vmatpush.msra.mxu0 %v174
    %195 = vmatpush.msra.mxu0 %v173
    %196 = vmatpush.msra.mxu0 %v172
    %197 = vmatpush.msra.mxu0 %v171
    %198 = vmatpush.msra.mxu0 %v170
    %199 = vmatpush.msra.mxu0 %v169
    %200 = vmatpush.msra.mxu0 %v168
    %201 = vmatmul.f32.gmra.mxu0 %v165
    %v202 = vpop.f32.mrf.mxu0
    %v203 = vadd.f32 %v184, %v202
    %204 = vmatmul.f32.gmra.mxu0 %v166
    %v205 = vpop.f32.mrf.mxu0
    %v206 = vadd.f32 %v184, %v205
    %207 = vdwg.mxu0
    %v208 = vmax.f32 %v203, 0.0
    %v209 = vmax.f32 %v206, 0.0
    %s210 = scalar_lea.vmem [#allocation2], 256
    %v211 = vld [vmem:[%s210] sm:$0xff]
    %v212 = vld [vmem:[%s210 + $0x8] sm:$0xff]
    %v213 = vld [vmem:[%s210 + $0x10] sm:$0xff]
    %v214 = vld [vmem:[%s210 + $0x18] sm:$0xff]
    %v215 = vld [vmem:[%s210 + $0x20] sm:$0xff]
    %v216 = vld [vmem:[%s210 + $0x28] sm:$0xff]
    %v217 = vld [vmem:[%s210 + $0x30] sm:$0xff]
    %v218 = vld [vmem:[%s210 + $0x38] sm:$0xff]
    %v219 = vld [vmem:[%s210 + $0x40] sm:$0xff]
    %v220 = vld [vmem:[%s210 + $0x48] sm:$0xff]
    %v221 = vld [vmem:[%s210 + $0x50] sm:$0xff]
    %v222 = vld [vmem:[%s210 + $0x58] sm:$0xff]
    %v223 = vld [vmem:[%s210 + $0x60] sm:$0xff]
    %v224 = vld [vmem:[%s210 + $0x68] sm:$0xff]
    %v225 = vld [vmem:[%s210 + $0x70] sm:$0xff]
    %v226 = vld [vmem:[%s210 + $0x78] sm:$0xff]
    %v227 = vperm.slane %v40, 0
    %228 = vmatpush.msra.mxu0 %v226
    %229 = vmatpush.msra.mxu0 %v225
    %230 = vmatpush.msra.mxu0 %v224
    %231 = vmatpush.msra.mxu0 %v223
    %232 = vmatpush.msra.mxu0 %v222
    %233 = vmatpush.msra.mxu0 %v221
    %234 = vmatpush.msra.mxu0 %v220
    %235 = vmatpush.msra.mxu0 %v219
    %236 = vmatpush.msra.mxu0 %v218
    %237 = vmatpush.msra.mxu0 %v217
    %238 = vmatpush.msra.mxu0 %v216
    %239 = vmatpush.msra.mxu0 %v215
    %240 = vmatpush.msra.mxu0 %v214
    %241 = vmatpush.msra.mxu0 %v213
    %242 = vmatpush.msra.mxu0 %v212
    %243 = vmatpush.msra.mxu0 %v211
    %244 = vmatmul.f32.gmra.mxu0 %v208
    %v245 = vpop.f32.mrf.mxu0
    %v246 = vadd.f32 %v227, %v245
    %247 = vmatmul.f32.gmra.mxu0 %v209
    %v248 = vpop.f32.mrf.mxu0
    %v249 = vadd.f32 %v227, %v248
    %250 = vdwg.mxu0
    %v251 = vadd.f32 %v165, %v246
    %v252 = vadd.f32 %v166, %v249
    %253 = vadd.xlane.f32.xlu0 %v251
    %v254 = vpop.xlane.xlu0 %253
    %255 = vadd.xlane.f32.xlu0 %v252
    %v256 = vpop.xlane.xlu0 %255
    %v257 = vmul.f32 %v254, 0.03125
    %v258 = vmul.f32 %v256, 0.03125
    %v259 = vsub.f32 %v251, %v257
    %v260 = vsub.f32 %v252, %v258
    %v261 = vmul.f32 %v259, %v126
    %v262 = vmul.f32 %v260, %v126
    %v263 = vmul.f32 %v261, %v261
    %v264 = vmul.f32 %v262, %v262
    %265 = vadd.xlane.f32.xlu0 %v263
    %v266 = vpop.xlane.xlu0 %265
    %267 = vadd.xlane.f32.xlu0 %v264
    %v268 = vpop.xlane.xlu0 %267
    %v269 = vmul.f32 %v266, 0.03125
    %v270 = vmul.f32 %v268, 0.03125
    %v271 = vadd.f32 %v269, 1e-05
    %v272 = vadd.f32 %v270, 1e-05
    %v273 = vrsqrt.pop %v271
    %v274 = vmul.f32 %v273, %v271
    %v275 = vmul.f32 %v274, %v273
    %v276 = vmul.f32 0.5, %v275
    %v277 = vsub.f32 1.5, %v276
    %v278 = vmul.f32 %v273, %v277
    %vm279 = vweird.f32 %v271
    %vm280 = vweird.f32 %v273
    %vm281 = vmor %vm279, %vm280
    %v282 = vsel %vm281, %v273, %v278
    %v283 = vrsqrt.pop %v272
    %v284 = vmul.f32 %v283, %v272
    %v285 = vmul.f32 %v284, %v283
    %v286 = vmul.f32 0.5, %v285
    %v287 = vsub.f32 1.5, %v286
    %v288 = vmul.f32 %v283, %v287
    %vm289 = vweird.f32 %v272
    %vm290 = vweird.f32 %v283
    %vm291 = vmor %vm289, %vm290
    %v292 = vsel %vm291, %v283, %v288
    %v293 = vmul.f32 %v261, %v282
    %v294 = vmul.f32 %v262, %v292
    %v295 = vperm.slane %v43, 0
    %v296 = vmul.f32 %v293, %v295
    %v297 = vmul.f32 %v294, %v295
    %v298 = vperm.slane %v44, 0
    %v299 = vadd.f32 %v296, %v298
    %v300 = vadd.f32 %v297, %v298
    %301 = vst [vmem:[%s4] sm:$0xff] %v299
    %302 = vst [vmem:[%s4 + $0x8] sm:$0xff] %v300
    // Predicated region
    $region22: #{forward.1} parent=1 // pred_check
      _
    $region23: #{forward.1} parent=1 // pred_check_branch
      %304 = sbr.rel (0) target = $region25
    $region24: #{forward.1} parent=1 // pred_region
      _
    $region25: #{forward.1} parent=1 // pred_fallthru
      _
    // Predicated region
    $region26: #{forward.1} parent=1 // pred_check
      _
    $region27: #{forward.1} parent=1 // pred_check_branch
      %306 = sbr.rel (0) target = $region29
    $region28: #{forward.1} parent=1 // pred_region
      _
    $region29: #{forward.1} parent=1 // pred_fallthru
      _
    %307 = vsyncpa [#allocation3], 1

</llo_original>
